<compile_context>
chip_gen: v6e
topology: v6e:2x2x1
jax: 0.10.0
libtpu: 0.0.40
codegen_flags: <defaults>
</compile_context>

<pallas_src>
import jax
import jax.numpy as jnp
from jax.experimental import pallas as pl
from jax.experimental.pallas import tpu as pltpu


def _se_block_kernel(x_ref, w1t_ref, w2t_ref, o_ref):
    """Fused SE block for a (Bblk, C, HW) slab.

    x_ref  : (Bblk, C, HW)  input feature map (NCHW with spatial flattened)
    w1t_ref: (C, Cr)        fc1 weight, pre-transposed (pooled @ w1t == fc1)
    w2t_ref: (Cr, C)        fc2 weight, pre-transposed
    o_ref  : (Bblk, C, HW)  x * sigmoid(fc2(relu(fc1(avg_pool(x)))))
    """
    # Squeeze: global average pool over the spatial (lane) axis, accumulated in
    # f32.  Only the small (Bblk, C) pooled matrix stays live across the
    # matmuls; the full tile is re-read from VMEM for the final rescale.
    pooled = jnp.mean(x_ref[...].astype(jnp.float32), axis=-1)        # (Bblk, C)

    # Excite: two bias-free Linear layers as batched MXU matmuls for the block.
    h = jnp.dot(pooled, w1t_ref[...].astype(jnp.float32),
                preferred_element_type=jnp.float32)                   # (Bblk, Cr)
    h = jnp.maximum(h, 0.0)                                           # ReLU
    s = jnp.dot(h, w2t_ref[...].astype(jnp.float32),
                preferred_element_type=jnp.float32)                   # (Bblk, C)

    # Sigmoid gate: EUP exp + EUP approximate reciprocal (stays off the VALU).
    gate = pl.reciprocal(1.0 + jnp.exp(-s), approx=True)              # (Bblk, C)

    # Scale: re-read the tile in its native dtype (keeps bf16 math in bf16 and
    # avoids holding a full f32 copy live) and broadcast the gate over HW lanes.
    gate = gate.astype(x_ref.dtype)
    o_ref[...] = (x_ref[...] * gate[:, :, None]).astype(o_ref.dtype)


def _largest_divisor_at_most(n, cap):
    cap = max(1, min(n, int(cap)))
    for d in range(cap, 0, -1):
        if n % d == 0:
            return d
    return 1


def se_block(x_nchw, fc1_w, fc2_w, *, target_block_bytes=2 * 1024 * 1024):
    """SEBlock forward.  x: (B, C, H, W); fc1_w: (C//r, C); fc2_w: (C, C//r)."""
    B, C, H, W = x_nchw.shape
    Cr = fc1_w.shape[0]
    assert fc1_w.shape == (Cr, C) and fc2_w.shape == (C, Cr)
    HW = H * W
    x3 = x_nchw.reshape(B, C, HW)                       # free (bitcast) reshape

    # Wrapper-side layout plumbing: pre-transpose the tiny weights once so the
    # excite step is two row-major batched matmuls inside the kernel.
    w1t = jnp.transpose(fc1_w)                          # (C, Cr)
    w2t = jnp.transpose(fc2_w)                          # (Cr, C)

    itemsize = x_nchw.dtype.itemsize
    per_elem_bytes = C * HW * itemsize

    # Generation-aware VMEM capacity (v7x: 64 MiB/TC vs 128 MiB on v5e/v6e).
    try:
        vmem_capacity = int(pltpu.get_tpu_info().vmem_capacity_bytes)
    except Exception:
        vmem_capacity = 64 * 1024 * 1024

    # Pack several batch elements per grid step so each DMA is ~1-4 MiB and the
    # per-step pipeline overhead is amortized (this kernel is pure HBM streaming).
    bblk = _largest_divisor_at_most(B, max(1, target_block_bytes // per_elem_bytes))
    # If everything collapsed into one very large block, split it so v7x's two
    # TensorCores both get work under dimension_semantics=("parallel",).
    if B // bblk == 1 and B > 1 and bblk * per_elem_bytes > 4 * target_block_bytes:
        bblk = _largest_divisor_at_most(B, max(1, bblk // 2))
    grid = (B // bblk,)

    block_bytes = bblk * per_elem_bytes
    weight_bytes = 2 * C * Cr * 4
    # in + out tiles, double-buffered, + weights + headroom; cap at half of VMEM.
    vmem_limit = int(min(vmem_capacity // 2,
                         max(4 * 1024 * 1024,
                             4 * block_bytes + weight_bytes + (1 << 20))))

    cost = pl.CostEstimate(
        flops=4 * B * C * Cr,                       # two (C x Cr) GEMMs per element
        transcendentals=2 * B * C,                  # exp + reciprocal for the gate
        bytes_accessed=2 * B * C * HW * itemsize + weight_bytes,
    )

    out = pl.pallas_call(
        _se_block_kernel,
        out_shape=jax.ShapeDtypeStruct((B, C, HW), x_nchw.dtype),
        grid=grid,
        in_specs=[
            pl.BlockSpec((bblk, C, HW), lambda b: (b, 0, 0)),
            pl.BlockSpec((C, Cr), lambda b: (0, 0)),
            pl.BlockSpec((Cr, C), lambda b: (0, 0)),
        ],
        out_specs=pl.BlockSpec((bblk, C, HW), lambda b: (b, 0, 0)),
        compiler_params=pltpu.CompilerParams(
            dimension_semantics=("parallel",),
            vmem_limit_bytes=vmem_limit,
        ),
        cost_estimate=cost,
    )(x3, w1t, w2t)
    return out.reshape(B, C, H, W)


def se_block_reference(x, fc1_w, fc2_w):
    """Pure-JAX reference matching the PyTorch SEBlock forward."""
    y = jnp.mean(x, axis=(2, 3))                        # (B, C)
    y = jnp.maximum(y @ fc1_w.T, 0.0)                   # (B, Cr)
    y = jax.nn.sigmoid(y @ fc2_w.T)                     # (B, C)
    return x * y[:, :, None, None]


if __name__ == "__main__":
    key = jax.random.PRNGKey(0)
    k_x, k_w1, k_w2 = jax.random.split(key, 3)

    B, C, H, W = 4, 128, 16, 16
    reduction = 16
    Cr = C // reduction                                 # = 8

    x = jax.random.normal(k_x, (B, C, H, W), jnp.float32)
    fc1_w = 0.1 * jax.random.normal(k_w1, (Cr, C), jnp.float32)  # nn.Linear(C, C//r)
    fc2_w = 0.1 * jax.random.normal(k_w2, (C, Cr), jnp.float32)  # nn.Linear(C//r, C)

    fwd = jax.jit(se_block)
    y = fwd(x, fc1_w, fc2_w)
    jax.block_until_ready(y)

    y_ref = se_block_reference(x, fc1_w, fc2_w)
    assert y.shape == (B, C, H, W)
    # Tolerance covers the approximate EUP reciprocal used for the sigmoid gate.
    assert jnp.allclose(y, y_ref, rtol=5e-3, atol=5e-3), "mismatch vs JAX reference"
    print("KERNEL_OK")
</pallas_src>

<mosaic_0001>
module attributes {stable_mosaic.version = 11 : i64} {
  func.func @_se_block_kernel(%arg0: i32, %arg1: memref<4x128x256xf32, #tpu.memory_space<vmem>>, %arg2: memref<128x8xf32, #tpu.memory_space<vmem>>, %arg3: memref<8x128xf32, #tpu.memory_space<vmem>>, %arg4: memref<4x128x256xf32, #tpu.memory_space<vmem>>) attributes {dimension_semantics = [#tpu.dimension_semantics<parallel>], iteration_bounds = array<i64: 1>, scalar_prefetch = 0 : i64, scratch_operands = 0 : i64, tpu.core_type = #tpu.core_type<tc>, window_params = [{transform_indices = @transform_0, window_bounds = array<i64: 4, 128, 256>}, {pipeline_mode = #tpu.pipeline_mode<synchronous>, transform_indices = @transform_1, window_bounds = array<i64: 128, 8>}, {pipeline_mode = #tpu.pipeline_mode<synchronous>, transform_indices = @transform_2, window_bounds = array<i64: 8, 128>}, {transform_indices = @transform_3, window_bounds = array<i64: 4, 128, 256>}]} {
    %c0 = arith.constant 0 : index
    %c0_0 = arith.constant 0 : index
    %c0_1 = arith.constant 0 : index
    %0 = vector.load %arg1[%c0, %c0_0, %c0_1] : memref<4x128x256xf32, #tpu.memory_space<vmem>>, vector<4x128x256xf32>
    %cst = arith.constant dense<0.000000e+00> : vector<4x128xf32>
    %1 = vector.multi_reduction <add>, %0, %cst [2] : vector<4x128x256xf32> to vector<4x128xf32>
    %cst_2 = arith.constant 2.560000e+02 : f32
    %2 = vector.broadcast %cst_2 : f32 to vector<4x128xf32>
    %3 = arith.divf %1, %2 : vector<4x128xf32>
    %c0_3 = arith.constant 0 : index
    %c0_4 = arith.constant 0 : index
    %4 = vector.load %arg2[%c0_3, %c0_4] : memref<128x8xf32, #tpu.memory_space<vmem>>, vector<128x8xf32>
    %cst_5 = arith.constant dense<0.000000e+00> : vector<4x8xf32>
    %5 = tpu.matmul %3, %4, %cst_5 {dimension_numbers = #tpu.dot_dimension_numbers<[1], [0], [0], [1], [0, 0, 1, 1], [], []>} : vector<4x128xf32>, vector<128x8xf32>, vector<4x8xf32> -> vector<4x8xf32>
    %cst_6 = arith.constant 0.000000e+00 : f32
    %6 = vector.broadcast %cst_6 : f32 to vector<4x8xf32>
    %7 = arith.maximumf %5, %6 : vector<4x8xf32>
    %c0_7 = arith.constant 0 : index
    %c0_8 = arith.constant 0 : index
    %8 = vector.load %arg3[%c0_7, %c0_8] : memref<8x128xf32, #tpu.memory_space<vmem>>, vector<8x128xf32>
    %cst_9 = arith.constant dense<0.000000e+00> : vector<4x128xf32>
    %9 = tpu.matmul %7, %8, %cst_9 {dimension_numbers = #tpu.dot_dimension_numbers<[1], [0], [0], [1], [0, 0, 1, 1], [], []>} : vector<4x8xf32>, vector<8x128xf32>, vector<4x128xf32> -> vector<4x128xf32>
    %cst_10 = arith.constant 0.000000e+00 : f32
    %10 = vector.broadcast %cst_10 : f32 to vector<4x128xf32>
    %11 = arith.subf %10, %9 : vector<4x128xf32>
    %12 = math.exp %11 : vector<4x128xf32>
    %cst_11 = arith.constant 1.000000e+00 : f32
    %13 = vector.broadcast %cst_11 : f32 to vector<4x128xf32>
    %14 = arith.addf %13, %12 : vector<4x128xf32>
    %15 = tpu.reciprocal %14 {approx = true} : vector<4x128xf32> -> vector<4x128xf32>
    %c0_12 = arith.constant 0 : index
    %c0_13 = arith.constant 0 : index
    %c0_14 = arith.constant 0 : index
    %16 = vector.load %arg1[%c0_12, %c0_13, %c0_14] : memref<4x128x256xf32, #tpu.memory_space<vmem>>, vector<4x128x256xf32>
    %17 = vector.shape_cast %15 : vector<4x128xf32> to vector<4x128x1xf32>
    %18 = vector.broadcast %17 : vector<4x128x1xf32> to vector<4x128x256xf32>
    %19 = arith.mulf %16, %18 : vector<4x128x256xf32>
    %c0_15 = arith.constant 0 : index
    %c0_16 = arith.constant 0 : index
    %c0_17 = arith.constant 0 : index
    %20 = vector.load %arg4[%c0_15, %c0_16, %c0_17] : memref<4x128x256xf32, #tpu.memory_space<vmem>>, vector<4x128x256xf32>
    tpu.vector_store %arg4[%c0_15, %c0_16, %c0_17], %19 {strides = array<i32>} : memref<4x128x256xf32, #tpu.memory_space<vmem>>, vector<4x128x256xf32>,
    return
  }
  func.func @transform_0(%arg0: i32) -> (i32, i32, i32) {
    %c0_i32 = arith.constant 0 : i32
    %c0_i32_0 = arith.constant 0 : i32
    %c0_i32_1 = arith.constant 0 : i32
    return %arg0, %c0_i32, %c0_i32_0 : i32, i32, i32
  }
  func.func @transform_1(%arg0: i32) -> (i32, i32) {
    %c0_i32 = arith.constant 0 : i32
    %c0_i32_0 = arith.constant 0 : i32
    %c0_i32_1 = arith.constant 0 : i32
    return %c0_i32, %c0_i32_0 : i32, i32
  }
  func.func @transform_2(%arg0: i32) -> (i32, i32) {
    %c0_i32 = arith.constant 0 : i32
    %c0_i32_0 = arith.constant 0 : i32
    %c0_i32_1 = arith.constant 0 : i32
    return %c0_i32, %c0_i32_0 : i32, i32
  }
  func.func @transform_3(%arg0: i32) -> (i32, i32, i32) {
    %c0_i32 = arith.constant 0 : i32
    %c0_i32_0 = arith.constant 0 : i32
    %c0_i32_1 = arith.constant 0 : i32
    return %arg0, %c0_i32, %c0_i32_0 : i32, i32, i32
  }
}

</mosaic_0001>

<llo_original>
// kernel: se_block.1
$region0: #{se_block.1}
  #allocation0 [shape = 'u32[]', space=smem, size = 0x4, offset = 0x4, fixed_abs, tag = 'smem constant byte address 0x4 - core index']
  #allocation1 [shape = 'u32[144,128]{1,0:T(1,128)}', space=vmem, size = 0x12000, scoped, tag = 'internal scratch']
  %s0 = inlined_call_operand.vmem [shape: f32[4,128,256], index: 0, kind: input, shape index: {}]
  %s1 = inlined_call_operand.vmem [shape: f32[128,8], index: 1, kind: input, shape index: {}]
  %s2 = inlined_call_operand.vmem [shape: f32[8,128], index: 2, kind: input, shape index: {}]
  %s3 = inlined_call_operand.vmem [shape: f32[4,128,256], index: 3, kind: output, shape index: {}]
  %s4 = sld [smem:[#allocation0]]
  $region22: #{se_block.1} parent=0
    _
  %s6 = ssub.s32 1, %s4
  %s7 = scalar_select 0, %s6, %s4
  // Predicated region
  $region2: #{se_block.1} parent=0 // pred_check
    _
  $region3: #{se_block.1} parent=0 // pred_check_branch
    %9 = sbr.rel (0) target = $region5
  $region4: #{se_block.1} parent=0 // pred_region
    _
  $region5: #{se_block.1} parent=0 // pred_fallthru
    _
  // Predicated region
  $region6: #{se_block.1} parent=0 // pred_check
    _
  $region7: #{se_block.1} parent=0 // pred_check_branch
    %11 = sbr.rel (0) target = $region9
  $region8: #{se_block.1} parent=0 // pred_region
    _
  $region9: #{se_block.1} parent=0 // pred_fallthru
    _
  // Predicated region
  $region10: #{se_block.1} parent=0 // pred_check
    _
  $region11: #{se_block.1} parent=0 // pred_check_branch
    %13 = sbr.rel (0) target = $region13
  $region12: #{se_block.1} parent=0 // pred_region
    _
  $region13: #{se_block.1} parent=0 // pred_fallthru
    _
  %v14 = vld [vmem:[%s0] sm:$0xff]
  %v15 = vld [vmem:[%s0 + $0x8] sm:$0xff]
  %v16 = vld [vmem:[%s0 + $0x10] sm:$0xff]
  %v17 = vld [vmem:[%s0 + $0x18] sm:$0xff]
  %v18 = vld [vmem:[%s0 + $0x20] sm:$0xff]
  %v19 = vld [vmem:[%s0 + $0x28] sm:$0xff]
  %v20 = vld [vmem:[%s0 + $0x30] sm:$0xff]
  %v21 = vld [vmem:[%s0 + $0x38] sm:$0xff]
  %v22 = vld [vmem:[%s0 + $0x40] sm:$0xff]
  %v23 = vld [vmem:[%s0 + $0x48] sm:$0xff]
  %v24 = vld [vmem:[%s0 + $0x50] sm:$0xff]
  %v25 = vld [vmem:[%s0 + $0x58] sm:$0xff]
  %v26 = vld [vmem:[%s0 + $0x60] sm:$0xff]
  %v27 = vld [vmem:[%s0 + $0x68] sm:$0xff]
  %v28 = vld [vmem:[%s0 + $0x70] sm:$0xff]
  %v29 = vld [vmem:[%s0 + $0x78] sm:$0xff]
  %v30 = vld [vmem:[%s0 + $0x80] sm:$0xff]
  %v31 = vld [vmem:[%s0 + $0x88] sm:$0xff]
  %v32 = vld [vmem:[%s0 + $0x90] sm:$0xff]
  %v33 = vld [vmem:[%s0 + $0x98] sm:$0xff]
  %v34 = vld [vmem:[%s0 + $0xa0] sm:$0xff]
  %v35 = vld [vmem:[%s0 + $0xa8] sm:$0xff]
  %v36 = vld [vmem:[%s0 + $0xb0] sm:$0xff]
  %v37 = vld [vmem:[%s0 + $0xb8] sm:$0xff]
  %v38 = vld [vmem:[%s0 + $0xc0] sm:$0xff]
  %v39 = vld [vmem:[%s0 + $0xc8] sm:$0xff]
  %v40 = vld [vmem:[%s0 + $0xd0] sm:$0xff]
  %v41 = vld [vmem:[%s0 + $0xd8] sm:$0xff]
  %v42 = vld [vmem:[%s0 + $0xe0] sm:$0xff]
  %v43 = vld [vmem:[%s0 + $0xe8] sm:$0xff]
  %v44 = vld [vmem:[%s0 + $0xf0] sm:$0xff]
  %v45 = vld [vmem:[%s0 + $0xf8] sm:$0xff]
  %v46 = vld [vmem:[%s0 + $0x100] sm:$0xff]
  %v47 = vld [vmem:[%s0 + $0x108] sm:$0xff]
  %v48 = vld [vmem:[%s0 + $0x110] sm:$0xff]
  %v49 = vld [vmem:[%s0 + $0x118] sm:$0xff]
  %v50 = vld [vmem:[%s0 + $0x120] sm:$0xff]
  %v51 = vld [vmem:[%s0 + $0x128] sm:$0xff]
  %v52 = vld [vmem:[%s0 + $0x130] sm:$0xff]
  %v53 = vld [vmem:[%s0 + $0x138] sm:$0xff]
  %v54 = vld [vmem:[%s0 + $0x140] sm:$0xff]
  %v55 = vld [vmem:[%s0 + $0x148] sm:$0xff]
  %v56 = vld [vmem:[%s0 + $0x150] sm:$0xff]
  %v57 = vld [vmem:[%s0 + $0x158] sm:$0xff]
  %v58 = vld [vmem:[%s0 + $0x160] sm:$0xff]
  %v59 = vld [vmem:[%s0 + $0x168] sm:$0xff]
  %v60 = vld [vmem:[%s0 + $0x170] sm:$0xff]
  %v61 = vld [vmem:[%s0 + $0x178] sm:$0xff]
  %v62 = vld [vmem:[%s0 + $0x180] sm:$0xff]
  %v63 = vld [vmem:[%s0 + $0x188] sm:$0xff]
  %v64 = vld [vmem:[%s0 + $0x190] sm:$0xff]
  %v65 = vld [vmem:[%s0 + $0x198] sm:$0xff]
  %v66 = vld [vmem:[%s0 + $0x1a0] sm:$0xff]
  %v67 = vld [vmem:[%s0 + $0x1a8] sm:$0xff]
  %v68 = vld [vmem:[%s0 + $0x1b0] sm:$0xff]
  %v69 = vld [vmem:[%s0 + $0x1b8] sm:$0xff]
  %v70 = vld [vmem:[%s0 + $0x1c0] sm:$0xff]
  %v71 = vld [vmem:[%s0 + $0x1c8] sm:$0xff]
  %v72 = vld [vmem:[%s0 + $0x1d0] sm:$0xff]
  %v73 = vld [vmem:[%s0 + $0x1d8] sm:$0xff]
  %v74 = vld [vmem:[%s0 + $0x1e0] sm:$0xff]
  %v75 = vld [vmem:[%s0 + $0x1e8] sm:$0xff]
  %v76 = vld [vmem:[%s0 + $0x1f0] sm:$0xff]
  %v77 = vld [vmem:[%s0 + $0x1f8] sm:$0xff]
  %v78 = vld [vmem:[%s0 + $0x200] sm:$0xff]
  %v79 = vld [vmem:[%s0 + $0x208] sm:$0xff]
  %v80 = vld [vmem:[%s0 + $0x210] sm:$0xff]
  %v81 = vld [vmem:[%s0 + $0x218] sm:$0xff]
  %v82 = vld [vmem:[%s0 + $0x220] sm:$0xff]
  %v83 = vld [vmem:[%s0 + $0x228] sm:$0xff]
  %v84 = vld [vmem:[%s0 + $0x230] sm:$0xff]
  %v85 = vld [vmem:[%s0 + $0x238] sm:$0xff]
  %v86 = vld [vmem:[%s0 + $0x240] sm:$0xff]
  %v87 = vld [vmem:[%s0 + $0x248] sm:$0xff]
  %v88 = vld [vmem:[%s0 + $0x250] sm:$0xff]
  %v89 = vld [vmem:[%s0 + $0x258] sm:$0xff]
  %v90 = vld [vmem:[%s0 + $0x260] sm:$0xff]
  %v91 = vld [vmem:[%s0 + $0x268] sm:$0xff]
  %v92 = vld [vmem:[%s0 + $0x270] sm:$0xff]
  %v93 = vld [vmem:[%s0 + $0x278] sm:$0xff]
  %v94 = vld [vmem:[%s0 + $0x280] sm:$0xff]
  %v95 = vld [vmem:[%s0 + $0x288] sm:$0xff]
  %v96 = vld [vmem:[%s0 + $0x290] sm:$0xff]
  %v97 = vld [vmem:[%s0 + $0x298] sm:$0xff]
  %v98 = vld [vmem:[%s0 + $0x2a0] sm:$0xff]
  %v99 = vld [vmem:[%s0 + $0x2a8] sm:$0xff]
  %v100 = vld [vmem:[%s0 + $0x2b0] sm:$0xff]
  %v101 = vld [vmem:[%s0 + $0x2b8] sm:$0xff]
  %v102 = vld [vmem:[%s0 + $0x2c0] sm:$0xff]
  %v103 = vld [vmem:[%s0 + $0x2c8] sm:$0xff]
  %v104 = vld [vmem:[%s0 + $0x2d0] sm:$0xff]
  %v105 = vld [vmem:[%s0 + $0x2d8] sm:$0xff]
  %v106 = vld [vmem:[%s0 + $0x2e0] sm:$0xff]
  %v107 = vld [vmem:[%s0 + $0x2e8] sm:$0xff]
  %v108 = vld [vmem:[%s0 + $0x2f0] sm:$0xff]
  %v109 = vld [vmem:[%s0 + $0x2f8] sm:$0xff]
  %v110 = vld [vmem:[%s0 + $0x300] sm:$0xff]
  %v111 = vld [vmem:[%s0 + $0x308] sm:$0xff]
  %v112 = vld [vmem:[%s0 + $0x310] sm:$0xff]
  %v113 = vld [vmem:[%s0 + $0x318] sm:$0xff]
  %v114 = vld [vmem:[%s0 + $0x320] sm:$0xff]
  %v115 = vld [vmem:[%s0 + $0x328] sm:$0xff]
  %v116 = vld [vmem:[%s0 + $0x330] sm:$0xff]
  %v117 = vld [vmem:[%s0 + $0x338] sm:$0xff]
  %v118 = vld [vmem:[%s0 + $0x340] sm:$0xff]
  %v119 = vld [vmem:[%s0 + $0x348] sm:$0xff]
  %v120 = vld [vmem:[%s0 + $0x350] sm:$0xff]
  %v121 = vld [vmem:[%s0 + $0x358] sm:$0xff]
  %v122 = vld [vmem:[%s0 + $0x360] sm:$0xff]
  %v123 = vld [vmem:[%s0 + $0x368] sm:$0xff]
  %v124 = vld [vmem:[%s0 + $0x370] sm:$0xff]
  %v125 = vld [vmem:[%s0 + $0x378] sm:$0xff]
  %v126 = vld [vmem:[%s0 + $0x380] sm:$0xff]
  %v127 = vld [vmem:[%s0 + $0x388] sm:$0xff]
  %v128 = vld [vmem:[%s0 + $0x390] sm:$0xff]
  %v129 = vld [vmem:[%s0 + $0x398] sm:$0xff]
  %v130 = vld [vmem:[%s0 + $0x3a0] sm:$0xff]
  %v131 = vld [vmem:[%s0 + $0x3a8] sm:$0xff]
  %v132 = vld [vmem:[%s0 + $0x3b0] sm:$0xff]
  %v133 = vld [vmem:[%s0 + $0x3b8] sm:$0xff]
  %v134 = vld [vmem:[%s0 + $0x3c0] sm:$0xff]
  %v135 = vld [vmem:[%s0 + $0x3c8] sm:$0xff]
  %v136 = vld [vmem:[%s0 + $0x3d0] sm:$0xff]
  %v137 = vld [vmem:[%s0 + $0x3d8] sm:$0xff]
  %v138 = vld [vmem:[%s0 + $0x3e0] sm:$0xff]
  %v139 = vld [vmem:[%s0 + $0x3e8] sm:$0xff]
  %v140 = vld [vmem:[%s0 + $0x3f0] sm:$0xff]
  %v141 = vld [vmem:[%s0 + $0x3f8] sm:$0xff]
  %v142 = vadd.f32 %v14, %v15
  %143 = vadd.xlane.f32.xlu0 %v142
  %v144 = vpop.xlane.xlu0 %143
  %v145 = vadd.f32 %v16, %v17
  %146 = vadd.xlane.f32.xlu0 %v145
  %v147 = vpop.xlane.xlu0 %146
  %v148 = vadd.f32 %v18, %v19
  %149 = vadd.xlane.f32.xlu0 %v148
  %v150 = vpop.xlane.xlu0 %149
  %v151 = vadd.f32 %v20, %v21
  %152 = vadd.xlane.f32.xlu0 %v151
  %v153 = vpop.xlane.xlu0 %152
  %v154 = vadd.f32 %v22, %v23
  %155 = vadd.xlane.f32.xlu0 %v154
  %v156 = vpop.xlane.xlu0 %155
  %v157 = vadd.f32 %v24, %v25
  %158 = vadd.xlane.f32.xlu0 %v157
  %v159 = vpop.xlane.xlu0 %158
  %v160 = vadd.f32 %v26, %v27
  %161 = vadd.xlane.f32.xlu0 %v160
  %v162 = vpop.xlane.xlu0 %161
  %v163 = vadd.f32 %v28, %v29
  %164 = vadd.xlane.f32.xlu0 %v163
  %v165 = vpop.xlane.xlu0 %164
  %v166 = vadd.f32 %v30, %v31
  %167 = vadd.xlane.f32.xlu0 %v166
  %v168 = vpop.xlane.xlu0 %167
  %v169 = vadd.f32 %v32, %v33
  %170 = vadd.xlane.f32.xlu0 %v169
  %v171 = vpop.xlane.xlu0 %170
  %v172 = vadd.f32 %v34, %v35
  %173 = vadd.xlane.f32.xlu0 %v172
  %v174 = vpop.xlane.xlu0 %173
  %v175 = vadd.f32 %v36, %v37
  %176 = vadd.xlane.f32.xlu0 %v175
  %v177 = vpop.xlane.xlu0 %176
  %v178 = vadd.f32 %v38, %v39
  %179 = vadd.xlane.f32.xlu0 %v178
  %v180 = vpop.xlane.xlu0 %179
  %v181 = vadd.f32 %v40, %v41
  %182 = vadd.xlane.f32.xlu0 %v181
  %v183 = vpop.xlane.xlu0 %182
  %v184 = vadd.f32 %v42, %v43
  %185 = vadd.xlane.f32.xlu0 %v184
  %v186 = vpop.xlane.xlu0 %185
  %v187 = vadd.f32 %v44, %v45
  %188 = vadd.xlane.f32.xlu0 %v187
  %v189 = vpop.xlane.xlu0 %188
  %v190 = vadd.f32 %v46, %v47
  %191 = vadd.xlane.f32.xlu0 %v190
  %v192 = vpop.xlane.xlu0 %191
  %v193 = vadd.f32 %v48, %v49
  %194 = vadd.xlane.f32.xlu0 %v193
  %v195 = vpop.xlane.xlu0 %194
  %v196 = vadd.f32 %v50, %v51
  %197 = vadd.xlane.f32.xlu0 %v196
  %v198 = vpop.xlane.xlu0 %197
  %v199 = vadd.f32 %v52, %v53
  %200 = vadd.xlane.f32.xlu0 %v199
  %v201 = vpop.xlane.xlu0 %200
  %v202 = vadd.f32 %v54, %v55
  %203 = vadd.xlane.f32.xlu0 %v202
  %v204 = vpop.xlane.xlu0 %203
  %v205 = vadd.f32 %v56, %v57
  %206 = vadd.xlane.f32.xlu0 %v205
  %v207 = vpop.xlane.xlu0 %206
  %v208 = vadd.f32 %v58, %v59
  %209 = vadd.xlane.f32.xlu0 %v208
  %v210 = vpop.xlane.xlu0 %209
  %v211 = vadd.f32 %v60, %v61
  %212 = vadd.xlane.f32.xlu0 %v211
  %v213 = vpop.xlane.xlu0 %212
  %v214 = vadd.f32 %v62, %v63
  %215 = vadd.xlane.f32.xlu0 %v214
  %v216 = vpop.xlane.xlu0 %215
  %v217 = vadd.f32 %v64, %v65
  %218 = vadd.xlane.f32.xlu0 %v217
  %v219 = vpop.xlane.xlu0 %218
  %v220 = vadd.f32 %v66, %v67
  %221 = vadd.xlane.f32.xlu0 %v220
  %v222 = vpop.xlane.xlu0 %221
  %v223 = vadd.f32 %v68, %v69
  %224 = vadd.xlane.f32.xlu0 %v223
  %v225 = vpop.xlane.xlu0 %224
  %v226 = vadd.f32 %v70, %v71
  %227 = vadd.xlane.f32.xlu0 %v226
  %v228 = vpop.xlane.xlu0 %227
  %v229 = vadd.f32 %v72, %v73
  %230 = vadd.xlane.f32.xlu0 %v229
  %v231 = vpop.xlane.xlu0 %230
  %v232 = vadd.f32 %v74, %v75
  %233 = vadd.xlane.f32.xlu0 %v232
  %v234 = vpop.xlane.xlu0 %233
  %v235 = vadd.f32 %v76, %v77
  %236 = vadd.xlane.f32.xlu0 %v235
  %v237 = vpop.xlane.xlu0 %236
  %v238 = vadd.f32 %v78, %v79
  %239 = vadd.xlane.f32.xlu0 %v238
  %v240 = vpop.xlane.xlu0 %239
  %v241 = vadd.f32 %v80, %v81
  %242 = vadd.xlane.f32.xlu0 %v241
  %v243 = vpop.xlane.xlu0 %242
  %v244 = vadd.f32 %v82, %v83
  %245 = vadd.xlane.f32.xlu0 %v244
  %v246 = vpop.xlane.xlu0 %245
  %v247 = vadd.f32 %v84, %v85
  %248 = vadd.xlane.f32.xlu0 %v247
  %v249 = vpop.xlane.xlu0 %248
  %v250 = vadd.f32 %v86, %v87
  %251 = vadd.xlane.f32.xlu0 %v250
  %v252 = vpop.xlane.xlu0 %251
  %v253 = vadd.f32 %v88, %v89
  %254 = vadd.xlane.f32.xlu0 %v253
  %v255 = vpop.xlane.xlu0 %254
  %v256 = vadd.f32 %v90, %v91
  %257 = vadd.xlane.f32.xlu0 %v256
  %v258 = vpop.xlane.xlu0 %257
  %v259 = vadd.f32 %v92, %v93
  %260 = vadd.xlane.f32.xlu0 %v259
  %v261 = vpop.xlane.xlu0 %260
  %v262 = vadd.f32 %v94, %v95
  %263 = vadd.xlane.f32.xlu0 %v262
  %v264 = vpop.xlane.xlu0 %263
  %v265 = vadd.f32 %v96, %v97
  %266 = vadd.xlane.f32.xlu0 %v265
  %v267 = vpop.xlane.xlu0 %266
  %v268 = vadd.f32 %v98, %v99
  %269 = vadd.xlane.f32.xlu0 %v268
  %v270 = vpop.xlane.xlu0 %269
  %v271 = vadd.f32 %v100, %v101
  %272 = vadd.xlane.f32.xlu0 %v271
  %v273 = vpop.xlane.xlu0 %272
  %v274 = vadd.f32 %v102, %v103
  %275 = vadd.xlane.f32.xlu0 %v274
  %v276 = vpop.xlane.xlu0 %275
  %v277 = vadd.f32 %v104, %v105
  %278 = vadd.xlane.f32.xlu0 %v277
  %v279 = vpop.xlane.xlu0 %278
  %v280 = vadd.f32 %v106, %v107
  %281 = vadd.xlane.f32.xlu0 %v280
  %v282 = vpop.xlane.xlu0 %281
  %v283 = vadd.f32 %v108, %v109
  %284 = vadd.xlane.f32.xlu0 %v283
  %v285 = vpop.xlane.xlu0 %284
  %v286 = vadd.f32 %v110, %v111
  %287 = vadd.xlane.f32.xlu0 %v286
  %v288 = vpop.xlane.xlu0 %287
  %v289 = vadd.f32 %v112, %v113
  %290 = vadd.xlane.f32.xlu0 %v289
  %v291 = vpop.xlane.xlu0 %290
  %v292 = vadd.f32 %v114, %v115
  %293 = vadd.xlane.f32.xlu0 %v292
  %v294 = vpop.xlane.xlu0 %293
  %v295 = vadd.f32 %v116, %v117
  %296 = vadd.xlane.f32.xlu0 %v295
  %v297 = vpop.xlane.xlu0 %296
  %v298 = vadd.f32 %v118, %v119
  %299 = vadd.xlane.f32.xlu0 %v298
  %v300 = vpop.xlane.xlu0 %299
  %v301 = vadd.f32 %v120, %v121
  %302 = vadd.xlane.f32.xlu0 %v301
  %v303 = vpop.xlane.xlu0 %302
  %v304 = vadd.f32 %v122, %v123
  %305 = vadd.xlane.f32.xlu0 %v304
  %v306 = vpop.xlane.xlu0 %305
  %v307 = vadd.f32 %v124, %v125
  %308 = vadd.xlane.f32.xlu0 %v307
  %v309 = vpop.xlane.xlu0 %308
  %v310 = vadd.f32 %v126, %v127
  %311 = vadd.xlane.f32.xlu0 %v310
  %v312 = vpop.xlane.xlu0 %311
  %v313 = vadd.f32 %v128, %v129
  %314 = vadd.xlane.f32.xlu0 %v313
  %v315 = vpop.xlane.xlu0 %314
  %v316 = vadd.f32 %v130, %v131
  %317 = vadd.xlane.f32.xlu0 %v316
  %v318 = vpop.xlane.xlu0 %317
  %v319 = vadd.f32 %v132, %v133
  %320 = vadd.xlane.f32.xlu0 %v319
  %v321 = vpop.xlane.xlu0 %320
  %v322 = vadd.f32 %v134, %v135
  %323 = vadd.xlane.f32.xlu0 %v322
  %v324 = vpop.xlane.xlu0 %323
  %v325 = vadd.f32 %v136, %v137
  %326 = vadd.xlane.f32.xlu0 %v325
  %v327 = vpop.xlane.xlu0 %326
  %v328 = vadd.f32 %v138, %v139
  %329 = vadd.xlane.f32.xlu0 %v328
  %v330 = vpop.xlane.xlu0 %329
  %v331 = vadd.f32 %v140, %v141
  %332 = vadd.xlane.f32.xlu0 %v331
  %v333 = vpop.xlane.xlu0 %332
  %v334 = vrcp.pop 256.0
  %v335 = vmul.f32 %v144, %v334
  %v336 = vmul.f32 %v147, %v334
  %v337 = vmul.f32 %v150, %v334
  %v338 = vmul.f32 %v153, %v334
  %v339 = vmul.f32 %v156, %v334
  %v340 = vmul.f32 %v159, %v334
  %v341 = vmul.f32 %v162, %v334
  %v342 = vmul.f32 %v165, %v334
  %v343 = vmul.f32 %v168, %v334
  %v344 = vmul.f32 %v171, %v334
  %v345 = vmul.f32 %v174, %v334
  %v346 = vmul.f32 %v177, %v334
  %v347 = vmul.f32 %v180, %v334
  %v348 = vmul.f32 %v183, %v334
  %v349 = vmul.f32 %v186, %v334
  %v350 = vmul.f32 %v189, %v334
  %v351 = vmul.f32 %v192, %v334
  %v352 = vmul.f32 %v195, %v334
  %v353 = vmul.f32 %v198, %v334
  %v354 = vmul.f32 %v201, %v334
  %v355 = vmul.f32 %v204, %v334
  %v356 = vmul.f32 %v207, %v334
  %v357 = vmul.f32 %v210, %v334
  %v358 = vmul.f32 %v213, %v334
  %v359 = vmul.f32 %v216, %v334
  %v360 = vmul.f32 %v219, %v334
  %v361 = vmul.f32 %v222, %v334
  %v362 = vmul.f32 %v225, %v334
  %v363 = vmul.f32 %v228, %v334
  %v364 = vmul.f32 %v231, %v334
  %v365 = vmul.f32 %v234, %v334
  %v366 = vmul.f32 %v237, %v334
  %v367 = vmul.f32 %v240, %v334
  %v368 = vmul.f32 %v243, %v334
  %v369 = vmul.f32 %v246, %v334
  %v370 = vmul.f32 %v249, %v334
  %v371 = vmul.f32 %v252, %v334
  %v372 = vmul.f32 %v255, %v334
  %v373 = vmul.f32 %v258, %v334
  %v374 = vmul.f32 %v261, %v334
  %v375 = vmul.f32 %v264, %v334
  %v376 = vmul.f32 %v267, %v334
  %v377 = vmul.f32 %v270, %v334
  %v378 = vmul.f32 %v273, %v334
  %v379 = vmul.f32 %v276, %v334
  %v380 = vmul.f32 %v279, %v334
  %v381 = vmul.f32 %v282, %v334
  %v382 = vmul.f32 %v285, %v334
  %v383 = vmul.f32 %v288, %v334
  %v384 = vmul.f32 %v291, %v334
  %v385 = vmul.f32 %v294, %v334
  %v386 = vmul.f32 %v297, %v334
  %v387 = vmul.f32 %v300, %v334
  %v388 = vmul.f32 %v303, %v334
  %v389 = vmul.f32 %v306, %v334
  %v390 = vmul.f32 %v309, %v334
  %v391 = vmul.f32 %v312, %v334
  %v392 = vmul.f32 %v315, %v334
  %v393 = vmul.f32 %v318, %v334
  %v394 = vmul.f32 %v321, %v334
  %v395 = vmul.f32 %v324, %v334
  %v396 = vmul.f32 %v327, %v334
  %v397 = vmul.f32 %v330, %v334
  %v398 = vmul.f32 %v333, %v334
  %v399 = vld [vmem:[%s1] sm:$0xff]
  %v400 = vld [vmem:[%s1 + $0x8] sm:$0xff]
  %v401 = vld [vmem:[%s1 + $0x10] sm:$0xff]
  %v402 = vld [vmem:[%s1 + $0x18] sm:$0xff]
  %v403 = vld [vmem:[%s1 + $0x20] sm:$0xff]
  %v404 = vld [vmem:[%s1 + $0x28] sm:$0xff]
  %v405 = vld [vmem:[%s1 + $0x30] sm:$0xff]
  %v406 = vld [vmem:[%s1 + $0x38] sm:$0xff]
  %v407 = vld [vmem:[%s1 + $0x40] sm:$0xff]
  %v408 = vld [vmem:[%s1 + $0x48] sm:$0xff]
  %v409 = vld [vmem:[%s1 + $0x50] sm:$0xff]
  %v410 = vld [vmem:[%s1 + $0x58] sm:$0xff]
  %v411 = vld [vmem:[%s1 + $0x60] sm:$0xff]
  %v412 = vld [vmem:[%s1 + $0x68] sm:$0xff]
  %v413 = vld [vmem:[%s1 + $0x70] sm:$0xff]
  %v414 = vld [vmem:[%s1 + $0x78] sm:$0xff]
  %v479 = vlaneseq
  %v480 = vand.u32 %v479, 127
  %v481 = vlaneseq
  %v482 = vshrl.u32 %v481, 7
  %v483 = vsub.s32 %v480, %v482
  %v484 = vrot.slane %v335, %v483
  %v485 = vadd.s32 %v480, 4294967288
  %v486 = vlaneseq
  %v487 = vshrl.u32 %v486, 7
  %v488 = vsub.s32 %v485, %v487
  %v489 = vrot.slane %v336, %v488
  %vm490 = vcmask 130112
  %v491 = vsel %vm490, %v489, %v484
  %v492 = vadd.s32 %v480, 4294967280
  %v493 = vlaneseq
  %v494 = vshrl.u32 %v493, 7
  %v495 = vsub.s32 %v492, %v494
  %v496 = vrot.slane %v337, %v495
  %vm497 = vcmask 195712
  %v498 = vsel %vm497, %v496, %v491
  %v499 = vadd.s32 %v480, 4294967272
  %v500 = vlaneseq
  %v501 = vshrl.u32 %v500, 7
  %v502 = vsub.s32 %v499, %v501
  %v503 = vrot.slane %v338, %v502
  %vm504 = vcmask 261312
  %v505 = vsel %vm504, %v503, %v498
  %v506 = vadd.s32 %v480, 4294967264
  %v507 = vlaneseq
  %v508 = vshrl.u32 %v507, 7
  %v509 = vsub.s32 %v506, %v508
  %v510 = vrot.slane %v339, %v509
  %vm511 = vcmask 326912
  %v512 = vsel %vm511, %v510, %v505
  %v513 = vadd.s32 %v480, 4294967256
  %v514 = vlaneseq
  %v515 = vshrl.u32 %v514, 7
  %v516 = vsub.s32 %v513, %v515
  %v517 = vrot.slane %v340, %v516
  %vm518 = vcmask 392512
  %v519 = vsel %vm518, %v517, %v512
  %v520 = vadd.s32 %v480, 4294967248
  %v521 = vlaneseq
  %v522 = vshrl.u32 %v521, 7
  %v523 = vsub.s32 %v520, %v522
  %v524 = vrot.slane %v341, %v523
  %vm525 = vcmask 458112
  %v526 = vsel %vm525, %v524, %v519
  %v527 = vadd.s32 %v480, 4294967240
  %v528 = vlaneseq
  %v529 = vshrl.u32 %v528, 7
  %v530 = vsub.s32 %v527, %v529
  %v531 = vrot.slane %v342, %v530
  %vm532 = vcmask 523712
  %v533 = vsel %vm532, %v531, %v526
  %v534 = vadd.s32 %v480, 4294967232
  %v535 = vlaneseq
  %v536 = vshrl.u32 %v535, 7
  %v537 = vsub.s32 %v534, %v536
  %v538 = vrot.slane %v343, %v537
  %vm539 = vcmask 589312
  %v540 = vsel %vm539, %v538, %v533
  %v541 = vadd.s32 %v480, 4294967224
  %v542 = vlaneseq
  %v543 = vshrl.u32 %v542, 7
  %v544 = vsub.s32 %v541, %v543
  %v545 = vrot.slane %v344, %v544
  %vm546 = vcmask 654912
  %v547 = vsel %vm546, %v545, %v540
  %v548 = vadd.s32 %v480, 4294967216
  %v549 = vlaneseq
  %v550 = vshrl.u32 %v549, 7
  %v551 = vsub.s32 %v548, %v550
  %v552 = vrot.slane %v345, %v551
  %vm553 = vcmask 720512
  %v554 = vsel %vm553, %v552, %v547
  %v555 = vadd.s32 %v480, 4294967208
  %v556 = vlaneseq
  %v557 = vshrl.u32 %v556, 7
  %v558 = vsub.s32 %v555, %v557
  %v559 = vrot.slane %v346, %v558
  %vm560 = vcmask 786112
  %v561 = vsel %vm560, %v559, %v554
  %v562 = vadd.s32 %v480, 4294967200
  %v563 = vlaneseq
  %v564 = vshrl.u32 %v563, 7
  %v565 = vsub.s32 %v562, %v564
  %v566 = vrot.slane %v347, %v565
  %vm567 = vcmask 851712
  %v568 = vsel %vm567, %v566, %v561
  %v569 = vadd.s32 %v480, 4294967192
  %v570 = vlaneseq
  %v571 = vshrl.u32 %v570, 7
  %v572 = vsub.s32 %v569, %v571
  %v573 = vrot.slane %v348, %v572
  %vm574 = vcmask 917312
  %v575 = vsel %vm574, %v573, %v568
  %v576 = vadd.s32 %v480, 4294967184
  %v577 = vlaneseq
  %v578 = vshrl.u32 %v577, 7
  %v579 = vsub.s32 %v576, %v578
  %v580 = vrot.slane %v349, %v579
  %vm581 = vcmask 982912
  %v582 = vsel %vm581, %v580, %v575
  %v583 = vadd.s32 %v480, 4294967176
  %v584 = vlaneseq
  %v585 = vshrl.u32 %v584, 7
  %v586 = vsub.s32 %v583, %v585
  %v587 = vrot.slane %v350, %v586
  %vm588 = vcmask 1048512
  %v589 = vsel %vm588, %v587, %v582
  %v590 = vlaneseq
  %v591 = vshrl.u32 %v590, 7
  %v592 = vsub.s32 %v480, %v591
  %v593 = vrot.slane %v351, %v592
  %v594 = vlaneseq
  %v595 = vshrl.u32 %v594, 7
  %v596 = vsub.s32 %v485, %v595
  %v597 = vrot.slane %v352, %v596
  %v598 = vsel %vm490, %v597, %v593
  %v599 = vlaneseq
  %v600 = vshrl.u32 %v599, 7
  %v601 = vsub.s32 %v492, %v600
  %v602 = vrot.slane %v353, %v601
  %v603 = vsel %vm497, %v602, %v598
  %v604 = vlaneseq
  %v605 = vshrl.u32 %v604, 7
  %v606 = vsub.s32 %v499, %v605
  %v607 = vrot.slane %v354, %v606
  %v608 = vsel %vm504, %v607, %v603
  %v609 = vlaneseq
  %v610 = vshrl.u32 %v609, 7
  %v611 = vsub.s32 %v506, %v610
  %v612 = vrot.slane %v355, %v611
  %v613 = vsel %vm511, %v612, %v608
  %v614 = vlaneseq
  %v615 = vshrl.u32 %v614, 7
  %v616 = vsub.s32 %v513, %v615
  %v617 = vrot.slane %v356, %v616
  %v618 = vsel %vm518, %v617, %v613
  %v619 = vlaneseq
  %v620 = vshrl.u32 %v619, 7
  %v621 = vsub.s32 %v520, %v620
  %v622 = vrot.slane %v357, %v621
  %v623 = vsel %vm525, %v622, %v618
  %v624 = vlaneseq
  %v625 = vshrl.u32 %v624, 7
  %v626 = vsub.s32 %v527, %v625
  %v627 = vrot.slane %v358, %v626
  %v628 = vsel %vm532, %v627, %v623
  %v629 = vlaneseq
  %v630 = vshrl.u32 %v629, 7
  %v631 = vsub.s32 %v534, %v630
  %v632 = vrot.slane %v359, %v631
  %v633 = vsel %vm539, %v632, %v628
  %v634 = vlaneseq
  %v635 = vshrl.u32 %v634, 7
  %v636 = vsub.s32 %v541, %v635
  %v637 = vrot.slane %v360, %v636
  %v638 = vsel %vm546, %v637, %v633
  %v639 = vlaneseq
  %v640 = vshrl.u32 %v639, 7
  %v641 = vsub.s32 %v548, %v640
  %v642 = vrot.slane %v361, %v641
  %v643 = vsel %vm553, %v642, %v638
  %v644 = vlaneseq
  %v645 = vshrl.u32 %v644, 7
  %v646 = vsub.s32 %v555, %v645
  %v647 = vrot.slane %v362, %v646
  %v648 = vsel %vm560, %v647, %v643
  %v649 = vlaneseq
  %v650 = vshrl.u32 %v649, 7
  %v651 = vsub.s32 %v562, %v650
  %v652 = vrot.slane %v363, %v651
  %v653 = vsel %vm567, %v652, %v648
  %v654 = vlaneseq
  %v655 = vshrl.u32 %v654, 7
  %v656 = vsub.s32 %v569, %v655
  %v657 = vrot.slane %v364, %v656
  %v658 = vsel %vm574, %v657, %v653
  %v659 = vlaneseq
  %v660 = vshrl.u32 %v659, 7
  %v661 = vsub.s32 %v576, %v660
  %v662 = vrot.slane %v365, %v661
  %v663 = vsel %vm581, %v662, %v658
  %v664 = vlaneseq
  %v665 = vshrl.u32 %v664, 7
  %v666 = vsub.s32 %v583, %v665
  %v667 = vrot.slane %v366, %v666
  %v668 = vsel %vm588, %v667, %v663
  %v669 = vlaneseq
  %v670 = vshrl.u32 %v669, 7
  %v671 = vsub.s32 %v480, %v670
  %v672 = vrot.slane %v367, %v671
  %v673 = vlaneseq
  %v674 = vshrl.u32 %v673, 7
  %v675 = vsub.s32 %v485, %v674
  %v676 = vrot.slane %v368, %v675
  %v677 = vsel %vm490, %v676, %v672
  %v678 = vlaneseq
  %v679 = vshrl.u32 %v678, 7
  %v680 = vsub.s32 %v492, %v679
  %v681 = vrot.slane %v369, %v680
  %v682 = vsel %vm497, %v681, %v677
  %v683 = vlaneseq
  %v684 = vshrl.u32 %v683, 7
  %v685 = vsub.s32 %v499, %v684
  %v686 = vrot.slane %v370, %v685
  %v687 = vsel %vm504, %v686, %v682
  %v688 = vlaneseq
  %v689 = vshrl.u32 %v688, 7
  %v690 = vsub.s32 %v506, %v689
  %v691 = vrot.slane %v371, %v690
  %v692 = vsel %vm511, %v691, %v687
  %v693 = vlaneseq
  %v694 = vshrl.u32 %v693, 7
  %v695 = vsub.s32 %v513, %v694
  %v696 = vrot.slane %v372, %v695
  %v697 = vsel %vm518, %v696, %v692
  %v698 = vlaneseq
  %v699 = vshrl.u32 %v698, 7
  %v700 = vsub.s32 %v520, %v699
  %v701 = vrot.slane %v373, %v700
  %v702 = vsel %vm525, %v701, %v697
  %v703 = vlaneseq
  %v704 = vshrl.u32 %v703, 7
  %v705 = vsub.s32 %v527, %v704
  %v706 = vrot.slane %v374, %v705
  %v707 = vsel %vm532, %v706, %v702
  %v708 = vlaneseq
  %v709 = vshrl.u32 %v708, 7
  %v710 = vsub.s32 %v534, %v709
  %v711 = vrot.slane %v375, %v710
  %v712 = vsel %vm539, %v711, %v707
  %v713 = vlaneseq
  %v714 = vshrl.u32 %v713, 7
  %v715 = vsub.s32 %v541, %v714
  %v716 = vrot.slane %v376, %v715
  %v717 = vsel %vm546, %v716, %v712
  %v718 = vlaneseq
  %v719 = vshrl.u32 %v718, 7
  %v720 = vsub.s32 %v548, %v719
  %v721 = vrot.slane %v377, %v720
  %v722 = vsel %vm553, %v721, %v717
  %v723 = vlaneseq
  %v724 = vshrl.u32 %v723, 7
  %v725 = vsub.s32 %v555, %v724
  %v726 = vrot.slane %v378, %v725
  %v727 = vsel %vm560, %v726, %v722
  %v728 = vlaneseq
  %v729 = vshrl.u32 %v728, 7
  %v730 = vsub.s32 %v562, %v729
  %v731 = vrot.slane %v379, %v730
  %v732 = vsel %vm567, %v731, %v727
  %v733 = vlaneseq
  %v734 = vshrl.u32 %v733, 7
  %v735 = vsub.s32 %v569, %v734
  %v736 = vrot.slane %v380, %v735
  %v737 = vsel %vm574, %v736, %v732
  %v738 = vlaneseq
  %v739 = vshrl.u32 %v738, 7
  %v740 = vsub.s32 %v576, %v739
  %v741 = vrot.slane %v381, %v740
  %v742 = vsel %vm581, %v741, %v737
  %v743 = vlaneseq
  %v744 = vshrl.u32 %v743, 7
  %v745 = vsub.s32 %v583, %v744
  %v746 = vrot.slane %v382, %v745
  %v747 = vsel %vm588, %v746, %v742
  %v748 = vlaneseq
  %v749 = vshrl.u32 %v748, 7
  %v750 = vsub.s32 %v480, %v749
  %v751 = vrot.slane %v383, %v750
  %v752 = vlaneseq
  %v753 = vshrl.u32 %v752, 7
  %v754 = vsub.s32 %v485, %v753
  %v755 = vrot.slane %v384, %v754
  %v756 = vsel %vm490, %v755, %v751
  %v757 = vlaneseq
  %v758 = vshrl.u32 %v757, 7
  %v759 = vsub.s32 %v492, %v758
  %v760 = vrot.slane %v385, %v759
  %v761 = vsel %vm497, %v760, %v756
  %v762 = vlaneseq
  %v763 = vshrl.u32 %v762, 7
  %v764 = vsub.s32 %v499, %v763
  %v765 = vrot.slane %v386, %v764
  %v766 = vsel %vm504, %v765, %v761
  %v767 = vlaneseq
  %v768 = vshrl.u32 %v767, 7
  %v769 = vsub.s32 %v506, %v768
  %v770 = vrot.slane %v387, %v769
  %v771 = vsel %vm511, %v770, %v766
  %v772 = vlaneseq
  %v773 = vshrl.u32 %v772, 7
  %v774 = vsub.s32 %v513, %v773
  %v775 = vrot.slane %v388, %v774
  %v776 = vsel %vm518, %v775, %v771
  %v777 = vlaneseq
  %v778 = vshrl.u32 %v777, 7
  %v779 = vsub.s32 %v520, %v778
  %v780 = vrot.slane %v389, %v779
  %v781 = vsel %vm525, %v780, %v776
  %v782 = vlaneseq
  %v783 = vshrl.u32 %v782, 7
  %v784 = vsub.s32 %v527, %v783
  %v785 = vrot.slane %v390, %v784
  %v786 = vsel %vm532, %v785, %v781
  %v787 = vlaneseq
  %v788 = vshrl.u32 %v787, 7
  %v789 = vsub.s32 %v534, %v788
  %v790 = vrot.slane %v391, %v789
  %v791 = vsel %vm539, %v790, %v786
  %v792 = vlaneseq
  %v793 = vshrl.u32 %v792, 7
  %v794 = vsub.s32 %v541, %v793
  %v795 = vrot.slane %v392, %v794
  %v796 = vsel %vm546, %v795, %v791
  %v797 = vlaneseq
  %v798 = vshrl.u32 %v797, 7
  %v799 = vsub.s32 %v548, %v798
  %v800 = vrot.slane %v393, %v799
  %v801 = vsel %vm553, %v800, %v796
  %v802 = vlaneseq
  %v803 = vshrl.u32 %v802, 7
  %v804 = vsub.s32 %v555, %v803
  %v805 = vrot.slane %v394, %v804
  %v806 = vsel %vm560, %v805, %v801
  %v807 = vlaneseq
  %v808 = vshrl.u32 %v807, 7
  %v809 = vsub.s32 %v562, %v808
  %v810 = vrot.slane %v395, %v809
  %v811 = vsel %vm567, %v810, %v806
  %v812 = vlaneseq
  %v813 = vshrl.u32 %v812, 7
  %v814 = vsub.s32 %v569, %v813
  %v815 = vrot.slane %v396, %v814
  %v816 = vsel %vm574, %v815, %v811
  %v817 = vlaneseq
  %v818 = vshrl.u32 %v817, 7
  %v819 = vsub.s32 %v576, %v818
  %v820 = vrot.slane %v397, %v819
  %v821 = vsel %vm581, %v820, %v816
  %v822 = vlaneseq
  %v823 = vshrl.u32 %v822, 7
  %v824 = vsub.s32 %v583, %v823
  %v825 = vrot.slane %v398, %v824
  %v826 = vsel %vm588, %v825, %v821
  %vm827 = vcmask 1041409
  %v828 = vsel %vm827, %v668, %v589
  %vm829 = vcmask 1042434
  %v830 = vsel %vm829, %v747, %v828
  %vm831 = vcmask 1043459
  %v832 = vsel %vm831, %v826, %v830
  %834 = vmatprep.subr.mxu0 0.0
  %835 = vmatpush1.msra.mxu0 %v414
  %836 = vmatprep.subr.mxu0 0.0
  %837 = vmatpush1.msra.mxu0 %v413
  %838 = vmatprep.subr.mxu0 0.0
  %839 = vmatpush1.msra.mxu0 %v412
  %840 = vmatprep.subr.mxu0 0.0
  %841 = vmatpush1.msra.mxu0 %v411
  %842 = vmatprep.subr.mxu0 0.0
  %843 = vmatpush1.msra.mxu0 %v410
  %844 = vmatprep.subr.mxu0 0.0
  %845 = vmatpush1.msra.mxu0 %v409
  %846 = vmatprep.subr.mxu0 0.0
  %847 = vmatpush1.msra.mxu0 %v408
  %848 = vmatprep.subr.mxu0 0.0
  %849 = vmatpush1.msra.mxu0 %v407
  %850 = vmatprep.subr.mxu0 0.0
  %851 = vmatpush1.msra.mxu0 %v406
  %852 = vmatprep.subr.mxu0 0.0
  %853 = vmatpush1.msra.mxu0 %v405
  %854 = vmatprep.subr.mxu0 0.0
  %855 = vmatpush1.msra.mxu0 %v404
  %856 = vmatprep.subr.mxu0 0.0
  %857 = vmatpush1.msra.mxu0 %v403
  %858 = vmatprep.subr.mxu0 0.0
  %859 = vmatpush1.msra.mxu0 %v402
  %860 = vmatprep.subr.mxu0 0.0
  %861 = vmatpush1.msra.mxu0 %v401
  %862 = vmatprep.subr.mxu0 0.0
  %863 = vmatpush1.msra.mxu0 %v400
  %864 = vmatprep.subr.mxu0 0.0
  %865 = vmatpush1.msra.mxu0 %v399
  %866 = vmatprep.subr.mxu0 0.0
  %867 = vmatpush2.msra.mxu0 0.0
  %868 = vmatprep.subr.mxu0 0.0
  %869 = vmatpush2.msra.mxu0 0.0
  %870 = vmatprep.subr.mxu0 0.0
  %871 = vmatpush2.msra.mxu0 0.0
  %872 = vmatprep.subr.mxu0 0.0
  %873 = vmatpush2.msra.mxu0 0.0
  %874 = vmatprep.subr.mxu0 0.0
  %875 = vmatpush2.msra.mxu0 0.0
  %876 = vmatprep.subr.mxu0 0.0
  %877 = vmatpush2.msra.mxu0 0.0
  %878 = vmatprep.subr.mxu0 0.0
  %879 = vmatpush2.msra.mxu0 0.0
  %880 = vmatprep.subr.mxu0 0.0
  %881 = vmatpush2.msra.mxu0 0.0
  %882 = vmatprep.subr.mxu0 0.0
  %883 = vmatpush2.msra.mxu0 0.0
  %884 = vmatprep.subr.mxu0 0.0
  %885 = vmatpush2.msra.mxu0 0.0
  %886 = vmatprep.subr.mxu0 0.0
  %887 = vmatpush2.msra.mxu0 0.0
  %888 = vmatprep.subr.mxu0 0.0
  %889 = vmatpush2.msra.mxu0 0.0
  %890 = vmatprep.subr.mxu0 0.0
  %891 = vmatpush2.msra.mxu0 0.0
  %892 = vmatprep.subr.mxu0 0.0
  %893 = vmatpush2.msra.mxu0 0.0
  %894 = vmatprep.subr.mxu0 0.0
  %895 = vmatpush2.msra.mxu0 0.0
  %896 = vmatprep.subr.mxu0 0.0
  %897 = vmatpush2.msra.mxu0 0.0
  %898 = vmatprep.mubr.f32.mxu0 0.0
  %899 = vmatmul.mubr.f32.gmra.mxu0 %v832
  %v900 = vpop.f32.mrf.mxu0
  %v901 = vadd.f32 0.0, %v900
  %v902 = vpop.f32.mrf.mxu0
  %903 = vdwg.mxu0
  %v904 = vmax.f32 %v901, 0.0
  %v905 = vld [vmem:[%s2] sm:$0xff]
  %vm906 = vcmask 64512
  %v908 = vsel %vm906, %v904, 0
  %910 = vmatprep.subr.mxu0 0.0
  %911 = vmatpush1.msra.mxu0 0.0
  %912 = vmatprep.subr.mxu0 0.0
  %913 = vmatpush1.msra.mxu0 0.0
  %914 = vmatprep.subr.mxu0 0.0
  %915 = vmatpush1.msra.mxu0 0.0
  %916 = vmatprep.subr.mxu0 0.0
  %917 = vmatpush1.msra.mxu0 0.0
  %918 = vmatprep.subr.mxu0 0.0
  %919 = vmatpush1.msra.mxu0 0.0
  %920 = vmatprep.subr.mxu0 0.0
  %921 = vmatpush1.msra.mxu0 0.0
  %922 = vmatprep.subr.mxu0 0.0
  %923 = vmatpush1.msra.mxu0 0.0
  %924 = vmatprep.subr.mxu0 0.0
  %925 = vmatpush1.msra.mxu0 0.0
  %926 = vmatprep.subr.mxu0 0.0
  %927 = vmatpush1.msra.mxu0 0.0
  %928 = vmatprep.subr.mxu0 0.0
  %929 = vmatpush1.msra.mxu0 0.0
  %930 = vmatprep.subr.mxu0 0.0
  %931 = vmatpush1.msra.mxu0 0.0
  %932 = vmatprep.subr.mxu0 0.0
  %933 = vmatpush1.msra.mxu0 0.0
  %934 = vmatprep.subr.mxu0 0.0
  %935 = vmatpush1.msra.mxu0 0.0
  %936 = vmatprep.subr.mxu0 0.0
  %937 = vmatpush1.msra.mxu0 0.0
  %938 = vmatprep.subr.mxu0 0.0
  %939 = vmatpush1.msra.mxu0 0.0
  %940 = vmatprep.subr.mxu0 0.0
  %941 = vmatpush1.msra.mxu0 %v905
  %942 = vmatprep.subr.mxu0 0.0
  %943 = vmatpush2.msra.mxu0 0.0
  %944 = vmatprep.subr.mxu0 0.0
  %945 = vmatpush2.msra.mxu0 0.0
  %946 = vmatprep.subr.mxu0 0.0
  %947 = vmatpush2.msra.mxu0 0.0
  %948 = vmatprep.subr.mxu0 0.0
  %949 = vmatpush2.msra.mxu0 0.0
  %950 = vmatprep.subr.mxu0 0.0
  %951 = vmatpush2.msra.mxu0 0.0
  %952 = vmatprep.subr.mxu0 0.0
  %953 = vmatpush2.msra.mxu0 0.0
  %954 = vmatprep.subr.mxu0 0.0
  %955 = vmatpush2.msra.mxu0 0.0
  %956 = vmatprep.subr.mxu0 0.0
  %957 = vmatpush2.msra.mxu0 0.0
  %958 = vmatprep.subr.mxu0 0.0
  %959 = vmatpush2.msra.mxu0 0.0
  %960 = vmatprep.subr.mxu0 0.0
  %961 = vmatpush2.msra.mxu0 0.0
  %962 = vmatprep.subr.mxu0 0.0
  %963 = vmatpush2.msra.mxu0 0.0
  %964 = vmatprep.subr.mxu0 0.0
  %965 = vmatpush2.msra.mxu0 0.0
  %966 = vmatprep.subr.mxu0 0.0
  %967 = vmatpush2.msra.mxu0 0.0
  %968 = vmatprep.subr.mxu0 0.0
  %969 = vmatpush2.msra.mxu0 0.0
  %970 = vmatprep.subr.mxu0 0.0
  %971 = vmatpush2.msra.mxu0 0.0
  %972 = vmatprep.subr.mxu0 0.0
  %973 = vmatpush2.msra.mxu0 0.0
  %974 = vmatprep.mubr.f32.mxu0 0.0
  %975 = vmatmul.mubr.f32.gmra.mxu0 %v908
  %v976 = vpop.f32.mrf.mxu0
  %v977 = vadd.f32 0.0, %v976
  %v978 = vpop.f32.mrf.mxu0
  %979 = vdwg.mxu0
  %v980 = vsub.f32 0.0, %v977
  %v981 = vmul.f32 %v980, 1.442695
  %v982 = vpow.pop %v981
  %v983 = vadd.f32 %v982, 1.0
  %v984 = vrcp.pop %v983
  %v985 = vlaneseq
  %v986 = vshrl.u32 %v985, 7
  %v987 = vsub.s32 0, %v986
  %v988 = vrot.slane %v984, %v987
  %990 = vbcast.lane.b32.xlu0 %v988, 256
  %v991 = vpop.permute.xlu0 %990
  %s993 = sor.u32 256, 8
  %994 = vbcast.lane.b32.xlu0 %v988, %s993
  %v995 = vpop.permute.xlu0 %994
  %s997 = sor.u32 256, 16
  %998 = vbcast.lane.b32.xlu0 %v988, %s997
  %v999 = vpop.permute.xlu0 %998
  %s1001 = sor.u32 256, 24
  %1002 = vbcast.lane.b32.xlu0 %v988, %s1001
  %v1003 = vpop.permute.xlu0 %1002
  %s1005 = sor.u32 256, 32
  %1006 = vbcast.lane.b32.xlu0 %v988, %s1005
  %v1007 = vpop.permute.xlu0 %1006
  %s1009 = sor.u32 256, 40
  %1010 = vbcast.lane.b32.xlu0 %v988, %s1009
  %v1011 = vpop.permute.xlu0 %1010
  %s1013 = sor.u32 256, 48
  %1014 = vbcast.lane.b32.xlu0 %v988, %s1013
  %v1015 = vpop.permute.xlu0 %1014
  %s1017 = sor.u32 256, 56
  %1018 = vbcast.lane.b32.xlu0 %v988, %s1017
  %v1019 = vpop.permute.xlu0 %1018
  %s1021 = sor.u32 256, 64
  %1022 = vbcast.lane.b32.xlu0 %v988, %s1021
  %v1023 = vpop.permute.xlu0 %1022
  %s1025 = sor.u32 256, 72
  %1026 = vbcast.lane.b32.xlu0 %v988, %s1025
  %v1027 = vpop.permute.xlu0 %1026
  %s1029 = sor.u32 256, 80
  %1030 = vbcast.lane.b32.xlu0 %v988, %s1029
  %v1031 = vpop.permute.xlu0 %1030
  %s1033 = sor.u32 256, 88
  %1034 = vbcast.lane.b32.xlu0 %v988, %s1033
  %v1035 = vpop.permute.xlu0 %1034
  %s1037 = sor.u32 256, 96
  %1038 = vbcast.lane.b32.xlu0 %v988, %s1037
  %v1039 = vpop.permute.xlu0 %1038
  %s1041 = sor.u32 256, 104
  %1042 = vbcast.lane.b32.xlu0 %v988, %s1041
  %v1043 = vpop.permute.xlu0 %1042
  %s1045 = sor.u32 256, 112
  %1046 = vbcast.lane.b32.xlu0 %v988, %s1045
  %v1047 = vpop.permute.xlu0 %1046
  %s1049 = sor.u32 256, 120
  %1050 = vbcast.lane.b32.xlu0 %v988, %s1049
  %v1051 = vpop.permute.xlu0 %1050
  %v1052 = vlaneseq
  %v1053 = vshrl.u32 %v1052, 7
  %v1054 = vsub.s32 1, %v1053
  %v1055 = vrot.slane %v984, %v1054
  %1057 = vbcast.lane.b32.xlu0 %v1055, 256
  %v1058 = vpop.permute.xlu0 %1057
  %s1060 = sor.u32 256, 8
  %1061 = vbcast.lane.b32.xlu0 %v1055, %s1060
  %v1062 = vpop.permute.xlu0 %1061
  %s1064 = sor.u32 256, 16
  %1065 = vbcast.lane.b32.xlu0 %v1055, %s1064
  %v1066 = vpop.permute.xlu0 %1065
  %s1068 = sor.u32 256, 24
  %1069 = vbcast.lane.b32.xlu0 %v1055, %s1068
  %v1070 = vpop.permute.xlu0 %1069
  %s1072 = sor.u32 256, 32
  %1073 = vbcast.lane.b32.xlu0 %v1055, %s1072
  %v1074 = vpop.permute.xlu0 %1073
  %s1076 = sor.u32 256, 40
  %1077 = vbcast.lane.b32.xlu0 %v1055, %s1076
  %v1078 = vpop.permute.xlu0 %1077
  %s1080 = sor.u32 256, 48
  %1081 = vbcast.lane.b32.xlu0 %v1055, %s1080
  %v1082 = vpop.permute.xlu0 %1081
  %s1084 = sor.u32 256, 56
  %1085 = vbcast.lane.b32.xlu0 %v1055, %s1084
  %v1086 = vpop.permute.xlu0 %1085
  %s1088 = sor.u32 256, 64
  %1089 = vbcast.lane.b32.xlu0 %v1055, %s1088
  %v1090 = vpop.permute.xlu0 %1089
  %s1092 = sor.u32 256, 72
  %1093 = vbcast.lane.b32.xlu0 %v1055, %s1092
  %v1094 = vpop.permute.xlu0 %1093
  %s1096 = sor.u32 256, 80
  %1097 = vbcast.lane.b32.xlu0 %v1055, %s1096
  %v1098 = vpop.permute.xlu0 %1097
  %s1100 = sor.u32 256, 88
  %1101 = vbcast.lane.b32.xlu0 %v1055, %s1100
  %v1102 = vpop.permute.xlu0 %1101
  %s1104 = sor.u32 256, 96
  %1105 = vbcast.lane.b32.xlu0 %v1055, %s1104
  %v1106 = vpop.permute.xlu0 %1105
  %s1108 = sor.u32 256, 104
  %1109 = vbcast.lane.b32.xlu0 %v1055, %s1108
  %v1110 = vpop.permute.xlu0 %1109
  %s1112 = sor.u32 256, 112
  %1113 = vbcast.lane.b32.xlu0 %v1055, %s1112
  %v1114 = vpop.permute.xlu0 %1113
  %s1116 = sor.u32 256, 120
  %1117 = vbcast.lane.b32.xlu0 %v1055, %s1116
  %v1118 = vpop.permute.xlu0 %1117
  %v1119 = vlaneseq
  %v1120 = vshrl.u32 %v1119, 7
  %v1121 = vsub.s32 2, %v1120
  %v1122 = vrot.slane %v984, %v1121
  %1124 = vbcast.lane.b32.xlu0 %v1122, 256
  %v1125 = vpop.permute.xlu0 %1124
  %s1127 = sor.u32 256, 8
  %1128 = vbcast.lane.b32.xlu0 %v1122, %s1127
  %v1129 = vpop.permute.xlu0 %1128
  %s1131 = sor.u32 256, 16
  %1132 = vbcast.lane.b32.xlu0 %v1122, %s1131
  %v1133 = vpop.permute.xlu0 %1132
  %s1135 = sor.u32 256, 24
  %1136 = vbcast.lane.b32.xlu0 %v1122, %s1135
  %v1137 = vpop.permute.xlu0 %1136
  %s1139 = sor.u32 256, 32
  %1140 = vbcast.lane.b32.xlu0 %v1122, %s1139
  %v1141 = vpop.permute.xlu0 %1140
  %s1143 = sor.u32 256, 40
  %1144 = vbcast.lane.b32.xlu0 %v1122, %s1143
  %v1145 = vpop.permute.xlu0 %1144
  %s1147 = sor.u32 256, 48
  %1148 = vbcast.lane.b32.xlu0 %v1122, %s1147
  %v1149 = vpop.permute.xlu0 %1148
  %s1151 = sor.u32 256, 56
  %1152 = vbcast.lane.b32.xlu0 %v1122, %s1151
  %v1153 = vpop.permute.xlu0 %1152
  %s1155 = sor.u32 256, 64
  %1156 = vbcast.lane.b32.xlu0 %v1122, %s1155
  %v1157 = vpop.permute.xlu0 %1156
  %s1159 = sor.u32 256, 72
  %1160 = vbcast.lane.b32.xlu0 %v1122, %s1159
  %v1161 = vpop.permute.xlu0 %1160
  %s1163 = sor.u32 256, 80
  %1164 = vbcast.lane.b32.xlu0 %v1122, %s1163
  %v1165 = vpop.permute.xlu0 %1164
  %s1167 = sor.u32 256, 88
  %1168 = vbcast.lane.b32.xlu0 %v1122, %s1167
  %v1169 = vpop.permute.xlu0 %1168
  %s1171 = sor.u32 256, 96
  %1172 = vbcast.lane.b32.xlu0 %v1122, %s1171
  %v1173 = vpop.permute.xlu0 %1172
  %s1175 = sor.u32 256, 104
  %1176 = vbcast.lane.b32.xlu0 %v1122, %s1175
  %v1177 = vpop.permute.xlu0 %1176
  %s1179 = sor.u32 256, 112
  %1180 = vbcast.lane.b32.xlu0 %v1122, %s1179
  %v1181 = vpop.permute.xlu0 %1180
  %s1183 = sor.u32 256, 120
  %1184 = vbcast.lane.b32.xlu0 %v1122, %s1183
  %v1185 = vpop.permute.xlu0 %1184
  %v1186 = vlaneseq
  %v1187 = vshrl.u32 %v1186, 7
  %v1188 = vsub.s32 3, %v1187
  %v1189 = vrot.slane %v984, %v1188
  %1191 = vbcast.lane.b32.xlu0 %v1189, 256
  %v1192 = vpop.permute.xlu0 %1191
  %s1194 = sor.u32 256, 8
  %1195 = vbcast.lane.b32.xlu0 %v1189, %s1194
  %v1196 = vpop.permute.xlu0 %1195
  %s1198 = sor.u32 256, 16
  %1199 = vbcast.lane.b32.xlu0 %v1189, %s1198
  %v1200 = vpop.permute.xlu0 %1199
  %s1202 = sor.u32 256, 24
  %1203 = vbcast.lane.b32.xlu0 %v1189, %s1202
  %v1204 = vpop.permute.xlu0 %1203
  %s1206 = sor.u32 256, 32
  %1207 = vbcast.lane.b32.xlu0 %v1189, %s1206
  %v1208 = vpop.permute.xlu0 %1207
  %s1210 = sor.u32 256, 40
  %1211 = vbcast.lane.b32.xlu0 %v1189, %s1210
  %v1212 = vpop.permute.xlu0 %1211
  %s1214 = sor.u32 256, 48
  %1215 = vbcast.lane.b32.xlu0 %v1189, %s1214
  %v1216 = vpop.permute.xlu0 %1215
  %s1218 = sor.u32 256, 56
  %1219 = vbcast.lane.b32.xlu0 %v1189, %s1218
  %v1220 = vpop.permute.xlu0 %1219
  %s1222 = sor.u32 256, 64
  %1223 = vbcast.lane.b32.xlu0 %v1189, %s1222
  %v1224 = vpop.permute.xlu0 %1223
  %s1226 = sor.u32 256, 72
  %1227 = vbcast.lane.b32.xlu0 %v1189, %s1226
  %v1228 = vpop.permute.xlu0 %1227
  %s1230 = sor.u32 256, 80
  %1231 = vbcast.lane.b32.xlu0 %v1189, %s1230
  %v1232 = vpop.permute.xlu0 %1231
  %s1234 = sor.u32 256, 88
  %1235 = vbcast.lane.b32.xlu0 %v1189, %s1234
  %v1236 = vpop.permute.xlu0 %1235
  %s1238 = sor.u32 256, 96
  %1239 = vbcast.lane.b32.xlu0 %v1189, %s1238
  %v1240 = vpop.permute.xlu0 %1239
  %s1242 = sor.u32 256, 104
  %1243 = vbcast.lane.b32.xlu0 %v1189, %s1242
  %v1244 = vpop.permute.xlu0 %1243
  %s1246 = sor.u32 256, 112
  %1247 = vbcast.lane.b32.xlu0 %v1189, %s1246
  %v1248 = vpop.permute.xlu0 %1247
  %s1250 = sor.u32 256, 120
  %1251 = vbcast.lane.b32.xlu0 %v1189, %s1250
  %v1252 = vpop.permute.xlu0 %1251
  %v1253 = vmul.f32 %v14, %v991
  %v1254 = vmul.f32 %v15, %v991
  %v1255 = vmul.f32 %v16, %v995
  %v1256 = vmul.f32 %v17, %v995
  %v1257 = vmul.f32 %v18, %v999
  %v1258 = vmul.f32 %v19, %v999
  %v1259 = vmul.f32 %v20, %v1003
  %v1260 = vmul.f32 %v21, %v1003
  %v1261 = vmul.f32 %v22, %v1007
  %v1262 = vmul.f32 %v23, %v1007
  %v1263 = vmul.f32 %v24, %v1011
  %v1264 = vmul.f32 %v25, %v1011
  %v1265 = vmul.f32 %v26, %v1015
  %v1266 = vmul.f32 %v27, %v1015
  %v1267 = vmul.f32 %v28, %v1019
  %v1268 = vmul.f32 %v29, %v1019
  %v1269 = vmul.f32 %v30, %v1023
  %v1270 = vmul.f32 %v31, %v1023
  %v1271 = vmul.f32 %v32, %v1027
  %v1272 = vmul.f32 %v33, %v1027
  %v1273 = vmul.f32 %v34, %v1031
  %v1274 = vmul.f32 %v35, %v1031
  %v1275 = vmul.f32 %v36, %v1035
  %v1276 = vmul.f32 %v37, %v1035
  %v1277 = vmul.f32 %v38, %v1039
  %v1278 = vmul.f32 %v39, %v1039
  %v1279 = vmul.f32 %v40, %v1043
  %v1280 = vmul.f32 %v41, %v1043
  %v1281 = vmul.f32 %v42, %v1047
  %v1282 = vmul.f32 %v43, %v1047
  %v1283 = vmul.f32 %v44, %v1051
  %v1284 = vmul.f32 %v45, %v1051
  %v1285 = vmul.f32 %v46, %v1058
  %v1286 = vmul.f32 %v47, %v1058
  %v1287 = vmul.f32 %v48, %v1062
  %v1288 = vmul.f32 %v49, %v1062
  %v1289 = vmul.f32 %v50, %v1066
  %v1290 = vmul.f32 %v51, %v1066
  %v1291 = vmul.f32 %v52, %v1070
  %v1292 = vmul.f32 %v53, %v1070
  %v1293 = vmul.f32 %v54, %v1074
  %v1294 = vmul.f32 %v55, %v1074
  %v1295 = vmul.f32 %v56, %v1078
  %v1296 = vmul.f32 %v57, %v1078
  %v1297 = vmul.f32 %v58, %v1082
  %v1298 = vmul.f32 %v59, %v1082
  %v1299 = vmul.f32 %v60, %v1086
  %v1300 = vmul.f32 %v61, %v1086
  %v1301 = vmul.f32 %v62, %v1090
  %v1302 = vmul.f32 %v63, %v1090
  %v1303 = vmul.f32 %v64, %v1094
  %v1304 = vmul.f32 %v65, %v1094
  %v1305 = vmul.f32 %v66, %v1098
  %v1306 = vmul.f32 %v67, %v1098
  %v1307 = vmul.f32 %v68, %v1102
  %v1308 = vmul.f32 %v69, %v1102
  %v1309 = vmul.f32 %v70, %v1106
  %v1310 = vmul.f32 %v71, %v1106
  %v1311 = vmul.f32 %v72, %v1110
  %v1312 = vmul.f32 %v73, %v1110
  %v1313 = vmul.f32 %v74, %v1114
  %v1314 = vmul.f32 %v75, %v1114
  %v1315 = vmul.f32 %v76, %v1118
  %v1316 = vmul.f32 %v77, %v1118
  %v1317 = vmul.f32 %v78, %v1125
  %v1318 = vmul.f32 %v79, %v1125
  %v1319 = vmul.f32 %v80, %v1129
  %v1320 = vmul.f32 %v81, %v1129
  %v1321 = vmul.f32 %v82, %v1133
  %v1322 = vmul.f32 %v83, %v1133
  %v1323 = vmul.f32 %v84, %v1137
  %v1324 = vmul.f32 %v85, %v1137
  %v1325 = vmul.f32 %v86, %v1141
  %v1326 = vmul.f32 %v87, %v1141
  %v1327 = vmul.f32 %v88, %v1145
  %v1328 = vmul.f32 %v89, %v1145
  %v1329 = vmul.f32 %v90, %v1149
  %v1330 = vmul.f32 %v91, %v1149
  %v1331 = vmul.f32 %v92, %v1153
  %v1332 = vmul.f32 %v93, %v1153
  %v1333 = vmul.f32 %v94, %v1157
  %v1334 = vmul.f32 %v95, %v1157
  %v1335 = vmul.f32 %v96, %v1161
  %v1336 = vmul.f32 %v97, %v1161
  %v1337 = vmul.f32 %v98, %v1165
  %v1338 = vmul.f32 %v99, %v1165
  %v1339 = vmul.f32 %v100, %v1169
  %v1340 = vmul.f32 %v101, %v1169
  %v1341 = vmul.f32 %v102, %v1173
  %v1342 = vmul.f32 %v103, %v1173
  %v1343 = vmul.f32 %v104, %v1177
  %v1344 = vmul.f32 %v105, %v1177
  %v1345 = vmul.f32 %v106, %v1181
  %v1346 = vmul.f32 %v107, %v1181
  %v1347 = vmul.f32 %v108, %v1185
  %v1348 = vmul.f32 %v109, %v1185
  %v1349 = vmul.f32 %v110, %v1192
  %v1350 = vmul.f32 %v111, %v1192
  %v1351 = vmul.f32 %v112, %v1196
  %v1352 = vmul.f32 %v113, %v1196
  %v1353 = vmul.f32 %v114, %v1200
  %v1354 = vmul.f32 %v115, %v1200
  %v1355 = vmul.f32 %v116, %v1204
  %v1356 = vmul.f32 %v117, %v1204
  %v1357 = vmul.f32 %v118, %v1208
  %v1358 = vmul.f32 %v119, %v1208
  %v1359 = vmul.f32 %v120, %v1212
  %v1360 = vmul.f32 %v121, %v1212
  %v1361 = vmul.f32 %v122, %v1216
  %v1362 = vmul.f32 %v123, %v1216
  %v1363 = vmul.f32 %v124, %v1220
  %v1364 = vmul.f32 %v125, %v1220
  %v1365 = vmul.f32 %v126, %v1224
  %v1366 = vmul.f32 %v127, %v1224
  %v1367 = vmul.f32 %v128, %v1228
  %v1368 = vmul.f32 %v129, %v1228
  %v1369 = vmul.f32 %v130, %v1232
  %v1370 = vmul.f32 %v131, %v1232
  %v1371 = vmul.f32 %v132, %v1236
  %v1372 = vmul.f32 %v133, %v1236
  %v1373 = vmul.f32 %v134, %v1240
  %v1374 = vmul.f32 %v135, %v1240
  %v1375 = vmul.f32 %v136, %v1244
  %v1376 = vmul.f32 %v137, %v1244
  %v1377 = vmul.f32 %v138, %v1248
  %v1378 = vmul.f32 %v139, %v1248
  %v1379 = vmul.f32 %v140, %v1252
  %v1380 = vmul.f32 %v141, %v1252
  %1381 = vst [vmem:[%s3] sm:$0xff] %v1253
  %1382 = vst [vmem:[%s3 + $0x8] sm:$0xff] %v1254
  %1383 = vst [vmem:[%s3 + $0x10] sm:$0xff] %v1255
  %1384 = vst [vmem:[%s3 + $0x18] sm:$0xff] %v1256
  %1385 = vst [vmem:[%s3 + $0x20] sm:$0xff] %v1257
  %1386 = vst [vmem:[%s3 + $0x28] sm:$0xff] %v1258
  %1387 = vst [vmem:[%s3 + $0x30] sm:$0xff] %v1259
  %1388 = vst [vmem:[%s3 + $0x38] sm:$0xff] %v1260
  %1389 = vst [vmem:[%s3 + $0x40] sm:$0xff] %v1261
  %1390 = vst [vmem:[%s3 + $0x48] sm:$0xff] %v1262
  %1391 = vst [vmem:[%s3 + $0x50] sm:$0xff] %v1263
  %1392 = vst [vmem:[%s3 + $0x58] sm:$0xff] %v1264
  %1393 = vst [vmem:[%s3 + $0x60] sm:$0xff] %v1265
  %1394 = vst [vmem:[%s3 + $0x68] sm:$0xff] %v1266
  %1395 = vst [vmem:[%s3 + $0x70] sm:$0xff] %v1267
  %1396 = vst [vmem:[%s3 + $0x78] sm:$0xff] %v1268
  %1397 = vst [vmem:[%s3 + $0x80] sm:$0xff] %v1269
  %1398 = vst [vmem:[%s3 + $0x88] sm:$0xff] %v1270
  %1399 = vst [vmem:[%s3 + $0x90] sm:$0xff] %v1271
  %1400 = vst [vmem:[%s3 + $0x98] sm:$0xff] %v1272
  %1401 = vst [vmem:[%s3 + $0xa0] sm:$0xff] %v1273
  %1402 = vst [vmem:[%s3 + $0xa8] sm:$0xff] %v1274
  %1403 = vst [vmem:[%s3 + $0xb0] sm:$0xff] %v1275
  %1404 = vst [vmem:[%s3 + $0xb8] sm:$0xff] %v1276
  %1405 = vst [vmem:[%s3 + $0xc0] sm:$0xff] %v1277
  %1406 = vst [vmem:[%s3 + $0xc8] sm:$0xff] %v1278
  %1407 = vst [vmem:[%s3 + $0xd0] sm:$0xff] %v1279
  %1408 = vst [vmem:[%s3 + $0xd8] sm:$0xff] %v1280
  %1409 = vst [vmem:[%s3 + $0xe0] sm:$0xff] %v1281
  %1410 = vst [vmem:[%s3 + $0xe8] sm:$0xff] %v1282
  %1411 = vst [vmem:[%s3 + $0xf0] sm:$0xff] %v1283
  %1412 = vst [vmem:[%s3 + $0xf8] sm:$0xff] %v1284
  %1413 = vst [vmem:[%s3 + $0x100] sm:$0xff] %v1285
  %1414 = vst [vmem:[%s3 + $0x108] sm:$0xff] %v1286
  %1415 = vst [vmem:[%s3 + $0x110] sm:$0xff] %v1287
  %1416 = vst [vmem:[%s3 + $0x118] sm:$0xff] %v1288
  %1417 = vst [vmem:[%s3 + $0x120] sm:$0xff] %v1289
  %1418 = vst [vmem:[%s3 + $0x128] sm:$0xff] %v1290
  %1419 = vst [vmem:[%s3 + $0x130] sm:$0xff] %v1291
  %1420 = vst [vmem:[%s3 + $0x138] sm:$0xff] %v1292
  %1421 = vst [vmem:[%s3 + $0x140] sm:$0xff] %v1293
  %1422 = vst [vmem:[%s3 + $0x148] sm:$0xff] %v1294
  %1423 = vst [vmem:[%s3 + $0x150] sm:$0xff] %v1295
  %1424 = vst [vmem:[%s3 + $0x158] sm:$0xff] %v1296
  %1425 = vst [vmem:[%s3 + $0x160] sm:$0xff] %v1297
  %1426 = vst [vmem:[%s3 + $0x168] sm:$0xff] %v1298
  %1427 = vst [vmem:[%s3 + $0x170] sm:$0xff] %v1299
  %1428 = vst [vmem:[%s3 + $0x178] sm:$0xff] %v1300
  %1429 = vst [vmem:[%s3 + $0x180] sm:$0xff] %v1301
  %1430 = vst [vmem:[%s3 + $0x188] sm:$0xff] %v1302
  %1431 = vst [vmem:[%s3 + $0x190] sm:$0xff] %v1303
  %1432 = vst [vmem:[%s3 + $0x198] sm:$0xff] %v1304
  %1433 = vst [vmem:[%s3 + $0x1a0] sm:$0xff] %v1305
  %1434 = vst [vmem:[%s3 + $0x1a8] sm:$0xff] %v1306
  %1435 = vst [vmem:[%s3 + $0x1b0] sm:$0xff] %v1307
  %1436 = vst [vmem:[%s3 + $0x1b8] sm:$0xff] %v1308
  %1437 = vst [vmem:[%s3 + $0x1c0] sm:$0xff] %v1309
  %1438 = vst [vmem:[%s3 + $0x1c8] sm:$0xff] %v1310
  %1439 = vst [vmem:[%s3 + $0x1d0] sm:$0xff] %v1311
  %1440 = vst [vmem:[%s3 + $0x1d8] sm:$0xff] %v1312
  %1441 = vst [vmem:[%s3 + $0x1e0] sm:$0xff] %v1313
  %1442 = vst [vmem:[%s3 + $0x1e8] sm:$0xff] %v1314
  %1443 = vst [vmem:[%s3 + $0x1f0] sm:$0xff] %v1315
  %1444 = vst [vmem:[%s3 + $0x1f8] sm:$0xff] %v1316
  %1445 = vst [vmem:[%s3 + $0x200] sm:$0xff] %v1317
  %1446 = vst [vmem:[%s3 + $0x208] sm:$0xff] %v1318
  %1447 = vst [vmem:[%s3 + $0x210] sm:$0xff] %v1319
  %1448 = vst [vmem:[%s3 + $0x218] sm:$0xff] %v1320
  %1449 = vst [vmem:[%s3 + $0x220] sm:$0xff] %v1321
  %1450 = vst [vmem:[%s3 + $0x228] sm:$0xff] %v1322
  %1451 = vst [vmem:[%s3 + $0x230] sm:$0xff] %v1323
  %1452 = vst [vmem:[%s3 + $0x238] sm:$0xff] %v1324
  %1453 = vst [vmem:[%s3 + $0x240] sm:$0xff] %v1325
  %1454 = vst [vmem:[%s3 + $0x248] sm:$0xff] %v1326
  %1455 = vst [vmem:[%s3 + $0x250] sm:$0xff] %v1327
  %1456 = vst [vmem:[%s3 + $0x258] sm:$0xff] %v1328
  %1457 = vst [vmem:[%s3 + $0x260] sm:$0xff] %v1329
  %1458 = vst [vmem:[%s3 + $0x268] sm:$0xff] %v1330
  %1459 = vst [vmem:[%s3 + $0x270] sm:$0xff] %v1331
  %1460 = vst [vmem:[%s3 + $0x278] sm:$0xff] %v1332
  %1461 = vst [vmem:[%s3 + $0x280] sm:$0xff] %v1333
  %1462 = vst [vmem:[%s3 + $0x288] sm:$0xff] %v1334
  %1463 = vst [vmem:[%s3 + $0x290] sm:$0xff] %v1335
  %1464 = vst [vmem:[%s3 + $0x298] sm:$0xff] %v1336
  %1465 = vst [vmem:[%s3 + $0x2a0] sm:$0xff] %v1337
  %1466 = vst [vmem:[%s3 + $0x2a8] sm:$0xff] %v1338
  %1467 = vst [vmem:[%s3 + $0x2b0] sm:$0xff] %v1339
  %1468 = vst [vmem:[%s3 + $0x2b8] sm:$0xff] %v1340
  %1469 = vst [vmem:[%s3 + $0x2c0] sm:$0xff] %v1341
  %1470 = vst [vmem:[%s3 + $0x2c8] sm:$0xff] %v1342
  %1471 = vst [vmem:[%s3 + $0x2d0] sm:$0xff] %v1343
  %1472 = vst [vmem:[%s3 + $0x2d8] sm:$0xff] %v1344
  %1473 = vst [vmem:[%s3 + $0x2e0] sm:$0xff] %v1345
  %1474 = vst [vmem:[%s3 + $0x2e8] sm:$0xff] %v1346
  %1475 = vst [vmem:[%s3 + $0x2f0] sm:$0xff] %v1347
  %1476 = vst [vmem:[%s3 + $0x2f8] sm:$0xff] %v1348
  %1477 = vst [vmem:[%s3 + $0x300] sm:$0xff] %v1349
  %1478 = vst [vmem:[%s3 + $0x308] sm:$0xff] %v1350
  %1479 = vst [vmem:[%s3 + $0x310] sm:$0xff] %v1351
  %1480 = vst [vmem:[%s3 + $0x318] sm:$0xff] %v1352
  %1481 = vst [vmem:[%s3 + $0x320] sm:$0xff] %v1353
  %1482 = vst [vmem:[%s3 + $0x328] sm:$0xff] %v1354
  %1483 = vst [vmem:[%s3 + $0x330] sm:$0xff] %v1355
  %1484 = vst [vmem:[%s3 + $0x338] sm:$0xff] %v1356
  %1485 = vst [vmem:[%s3 + $0x340] sm:$0xff] %v1357
  %1486 = vst [vmem:[%s3 + $0x348] sm:$0xff] %v1358
  %1487 = vst [vmem:[%s3 + $0x350] sm:$0xff] %v1359
  %1488 = vst [vmem:[%s3 + $0x358] sm:$0xff] %v1360
  %1489 = vst [vmem:[%s3 + $0x360] sm:$0xff] %v1361
  %1490 = vst [vmem:[%s3 + $0x368] sm:$0xff] %v1362
  %1491 = vst [vmem:[%s3 + $0x370] sm:$0xff] %v1363
  %1492 = vst [vmem:[%s3 + $0x378] sm:$0xff] %v1364
  %1493 = vst [vmem:[%s3 + $0x380] sm:$0xff] %v1365
  %1494 = vst [vmem:[%s3 + $0x388] sm:$0xff] %v1366
  %1495 = vst [vmem:[%s3 + $0x390] sm:$0xff] %v1367
  %1496 = vst [vmem:[%s3 + $0x398] sm:$0xff] %v1368
  %1497 = vst [vmem:[%s3 + $0x3a0] sm:$0xff] %v1369
  %1498 = vst [vmem:[%s3 + $0x3a8] sm:$0xff] %v1370
  %1499 = vst [vmem:[%s3 + $0x3b0] sm:$0xff] %v1371
  %1500 = vst [vmem:[%s3 + $0x3b8] sm:$0xff] %v1372
  %1501 = vst [vmem:[%s3 + $0x3c0] sm:$0xff] %v1373
  %1502 = vst [vmem:[%s3 + $0x3c8] sm:$0xff] %v1374
  %1503 = vst [vmem:[%s3 + $0x3d0] sm:$0xff] %v1375
  %1504 = vst [vmem:[%s3 + $0x3d8] sm:$0xff] %v1376
  %1505 = vst [vmem:[%s3 + $0x3e0] sm:$0xff] %v1377
  %1506 = vst [vmem:[%s3 + $0x3e8] sm:$0xff] %v1378
  %1507 = vst [vmem:[%s3 + $0x3f0] sm:$0xff] %v1379
  %1508 = vst [vmem:[%s3 + $0x3f8] sm:$0xff] %v1380
  // Predicated region
  $region14: #{se_block.1} parent=0 // pred_check
    _
  $region15: #{se_block.1} parent=0 // pred_check_branch
    %1510 = sbr.rel (0) target = $region17
  $region16: #{se_block.1} parent=0 // pred_region
    _
  $region17: #{se_block.1} parent=0 // pred_fallthru
    _
  // Predicated region
  $region18: #{se_block.1} parent=0 // pred_check
    _
  $region19: #{se_block.1} parent=0 // pred_check_branch
    %1512 = sbr.rel (0) target = $region21
  $region20: #{se_block.1} parent=0 // pred_region
    _
  $region21: #{se_block.1} parent=0 // pred_fallthru
    _

</llo_original>
